<compile_context>
chip_gen: v7x
topology: tpu7x:2x2x1
jax: 0.10.0
libtpu: 0.0.40
codegen_flags: <defaults>
</compile_context>

<pallas_src>
import functools

import numpy as np
import jax
import jax.numpy as jnp
from jax.experimental import pallas as pl
from jax.experimental.pallas import tpu as pltpu


def _cdiv(a, b):
    return (a + b - 1) // b


def _round_up(x, m):
    return ((x + m - 1) // m) * m


@functools.lru_cache(maxsize=None)
def make_one_hot_encoder(d_in, n_rows):
    """Builds a jitted callable one-hot-encoding an (n_rows, len(d_in)) int matrix."""
    d_in = tuple(int(d) for d in d_in)
    C = len(d_in)
    offsets = [0]
    for d in d_in:
        offsets.append(offsets[-1] + d)
    D_total = int(offsets[-1])
    N = int(n_rows)

    # ---- generation-aware row-tile sizing --------------------------------
    try:
        vmem_bytes = int(pltpu.get_tpu_info().vmem_capacity_bytes)
    except Exception:  # pragma: no cover - conservative fallback
        vmem_bytes = 64 << 20  # v7x per-TensorCore VMEM (smallest of v5e/v6e/v7x)

    tile_budget = vmem_bytes // 3                      # double-buffered in+out tiles
    vmem_limit = int(min(vmem_bytes, max(32 << 20, tile_budget + (16 << 20))))

    c_pad = _round_up(max(C, 1), 128)                  # lane padding of the index tile
    d_pad = _round_up(max(D_total, 1), 128)            # lane padding of the output tile
    bytes_per_row = 2 * 4 * (c_pad + d_pad)            # x2 double-buffer, 4 B per elem
    tm = tile_budget // max(bytes_per_row, 1)
    tm = max(8, (tm // 8) * 8)
    if N > 8:
        # Guarantee >= 2 row tiles so v7x's two TensorCores both get work.
        tm = min(tm, _round_up(_cdiv(N, 2), 8))
    tm = max(8, min(tm, _round_up(N, 8)))
    grid = (_cdiv(N, tm),)                             # partial last block is masked

    # ---- kernel body ------------------------------------------------------
    use_mxu = C >= 16

    # Constant selector / offset tables for the MXU path.
    sel_np = np.zeros((C, D_total), np.float32)
    off_np = np.zeros((1, D_total), np.float32)
    for c in range(C):
        sel_np[c, offsets[c]:offsets[c + 1]] = 1.0
        off_np[0, offsets[c]:offsets[c + 1]] = float(offsets[c])

    if use_mxu:
        def kernel(x_ref, sel_ref, off_ref, o_ref):
            # target[n, j] = x[n, col(j)] + offsets[col(j)], via one MXU matmul
            # (f32 is exact for indices/offsets < 2^24).
            xf = x_ref[...].astype(jnp.float32)
            lanes = jax.lax.broadcasted_iota(jnp.float32, (1, D_total), 1)
            target = jnp.dot(xf, sel_ref[...],
                             preferred_element_type=jnp.float32) + off_ref[...]
            o_ref[...] = (lanes == target).astype(jnp.float32)

        extra_in_specs = [
            pl.BlockSpec((C, D_total), lambda r: (0, 0)),
            pl.BlockSpec((1, D_total), lambda r: (0, 0)),
        ]
    else:
        def kernel(x_ref, o_ref):
            xv = x_ref[...]  # (tm, C) int32, single load
            lanes = jax.lax.broadcasted_iota(jnp.int32, (1, D_total), 1)
            # Per-lane target index built with a short where-chain over the
            # static, ordered, disjoint column lane-ranges (fine for small C).
            target = xv[:, C - 1:C] + offsets[C - 1]
            for i in range(C - 2, -1, -1):
                target = jnp.where(lanes < offsets[i + 1],
                                   xv[:, i:i + 1] + offsets[i],
                                   target)
            o_ref[...] = (lanes == target).astype(jnp.float32)

        extra_in_specs = []

    fn = pl.pallas_call(
        kernel,
        out_shape=jax.ShapeDtypeStruct((N, D_total), jnp.float32),
        grid=grid,
        in_specs=[pl.BlockSpec((tm, C), lambda r: (r, 0))] + extra_in_specs,
        out_specs=pl.BlockSpec((tm, D_total), lambda r: (r, 0)),
        compiler_params=pltpu.CompilerParams(
            dimension_semantics=("parallel",),
            vmem_limit_bytes=vmem_limit,
        ),
    )

    if use_mxu:
        sel = jnp.asarray(sel_np)
        off = jnp.asarray(off_np)

        @jax.jit
        def run(x):
            return fn(x.astype(jnp.int32), sel, off)
    else:
        @jax.jit
        def run(x):
            return fn(x.astype(jnp.int32))

    return run, D_total


def one_hot_encoder_forward(x, d_in):
    run, _ = make_one_hot_encoder(tuple(int(d) for d in d_in), int(x.shape[0]))
    return run(x)


def _reference(x, d_in):
    return jnp.concatenate(
        [jax.nn.one_hot(x[:, i], d_in[i], dtype=jnp.float32) for i in range(len(d_in))],
        axis=1,
    )


if __name__ == "__main__":
    key = jax.random.PRNGKey(0)

    # Case 1: small C -> where-chain path (matches the original module demo).
    d_in_a = (4, 5, 7)
    N_a = 10                            # deliberately not a multiple of 8
    keys = jax.random.split(key, len(d_in_a) + 1)
    cols = [jax.random.randint(keys[i], (N_a, 1), 0, d_in_a[i], dtype=jnp.int32)
            for i in range(len(d_in_a))]
    x_a = jnp.concatenate(cols, axis=1)                 # (10, 3) int32

    out_a = jax.block_until_ready(one_hot_encoder_forward(x_a, d_in_a))
    ref_a = _reference(x_a, d_in_a)
    assert out_a.shape == (N_a, sum(d_in_a)) and out_a.dtype == jnp.float32
    np.testing.assert_allclose(np.asarray(out_a), np.asarray(ref_a), atol=0, rtol=0)

    # Case 2: wide C -> MXU selector-matmul path.
    d_in_b = tuple(2 + (i % 5) for i in range(20))       # C = 20, sum = 80
    N_b = 37                                             # exercises partial last tile
    keys_b = jax.random.split(keys[-1], len(d_in_b))
    cols_b = [jax.random.randint(keys_b[i], (N_b, 1), 0, d_in_b[i], dtype=jnp.int32)
              for i in range(len(d_in_b))]
    x_b = jnp.concatenate(cols_b, axis=1)                # (37, 20) int32

    out_b = jax.block_until_ready(one_hot_encoder_forward(x_b, d_in_b))
    ref_b = _reference(x_b, d_in_b)
    assert out_b.shape == (N_b, sum(d_in_b)) and out_b.dtype == jnp.float32
    np.testing.assert_allclose(np.asarray(out_b), np.asarray(ref_b), atol=0, rtol=0)

    print("KERNEL_OK")
</pallas_src>

<mosaic_0001>
module attributes {stable_mosaic.version = 11 : i64} {
  func.func @kernel(%arg0: i32, %arg1: memref<8x3xi32, #tpu.memory_space<vmem>>, %arg2: memref<8x16xf32, #tpu.memory_space<vmem>>) attributes {dimension_semantics = [#tpu.dimension_semantics<parallel>], iteration_bounds = array<i64: 2>, scalar_prefetch = 0 : i64, scratch_operands = 0 : i64, tpu.core_type = #tpu.core_type<tc>, window_params = [{transform_indices = @transform_0, window_bounds = array<i64: 8, 3>}, {transform_indices = @transform_1, window_bounds = array<i64: 8, 16>}]} {
    %c0 = arith.constant 0 : index
    %c0_0 = arith.constant 0 : index
    %0 = vector.load %arg1[%c0, %c0_0] : memref<8x3xi32, #tpu.memory_space<vmem>>, vector<8x3xi32>
    %1 = tpu.iota {dimensions = array<i32: 1>} : vector<1x16xi32>
    %2 = vector.extract_strided_slice %0 {offsets = [0, 2], sizes = [8, 1], strides = [1, 1]} : vector<8x3xi32> to vector<8x1xi32>
    %c9_i32 = arith.constant 9 : i32
    %3 = vector.broadcast %c9_i32 : i32 to vector<8x1xi32>
    %4 = arith.addi %2, %3 : vector<8x1xi32>
    %c9_i32_1 = arith.constant 9 : i32
    %5 = vector.broadcast %c9_i32_1 : i32 to vector<1x16xi32>
    %6 = arith.cmpi slt, %1, %5 : vector<1x16xi32>
    %7 = vector.extract_strided_slice %0 {offsets = [0, 1], sizes = [8, 1], strides = [1, 1]} : vector<8x3xi32> to vector<8x1xi32>
    %c4_i32 = arith.constant 4 : i32
    %8 = vector.broadcast %c4_i32 : i32 to vector<8x1xi32>
    %9 = arith.addi %7, %8 : vector<8x1xi32>
    %10 = vector.shape_cast %6 : vector<1x16xi1> to vector<1x16xi1>
    %11 = vector.broadcast %10 : vector<1x16xi1> to vector<8x16xi1>
    %12 = vector.shape_cast %9 : vector<8x1xi32> to vector<8x1xi32>
    %13 = vector.broadcast %12 : vector<8x1xi32> to vector<8x16xi32>
    %14 = vector.shape_cast %4 : vector<8x1xi32> to vector<8x1xi32>
    %15 = vector.broadcast %14 : vector<8x1xi32> to vector<8x16xi32>
    %16 = arith.select %11, %13, %15 : vector<8x16xi1>, vector<8x16xi32>
    %c4_i32_2 = arith.constant 4 : i32
    %17 = vector.broadcast %c4_i32_2 : i32 to vector<1x16xi32>
    %18 = arith.cmpi slt, %1, %17 : vector<1x16xi32>
    %19 = vector.extract_strided_slice %0 {offsets = [0, 0], sizes = [8, 1], strides = [1, 1]} : vector<8x3xi32> to vector<8x1xi32>
    %c0_i32 = arith.constant 0 : i32
    %20 = vector.broadcast %c0_i32 : i32 to vector<8x1xi32>
    %21 = arith.addi %19, %20 : vector<8x1xi32>
    %22 = vector.shape_cast %18 : vector<1x16xi1> to vector<1x16xi1>
    %23 = vector.broadcast %22 : vector<1x16xi1> to vector<8x16xi1>
    %24 = vector.shape_cast %21 : vector<8x1xi32> to vector<8x1xi32>
    %25 = vector.broadcast %24 : vector<8x1xi32> to vector<8x16xi32>
    %26 = arith.select %23, %25, %16 : vector<8x16xi1>, vector<8x16xi32>
    %27 = vector.broadcast %1 : vector<1x16xi32> to vector<8x16xi32>
    %28 = arith.cmpi eq, %27, %26 : vector<8x16xi32>
    %29 = arith.extui %28 : vector<8x16xi1> to vector<8x16xi32>
    %30 = arith.sitofp %29 : vector<8x16xi32> to vector<8x16xf32>
    %c0_3 = arith.constant 0 : index
    %c0_4 = arith.constant 0 : index
    %31 = vector.load %arg2[%c0_3, %c0_4] : memref<8x16xf32, #tpu.memory_space<vmem>>, vector<8x16xf32>
    tpu.vector_store %arg2[%c0_3, %c0_4], %30 {strides = array<i32>} : memref<8x16xf32, #tpu.memory_space<vmem>>, vector<8x16xf32>,
    return
  }
  func.func @transform_0(%arg0: i32) -> (i32, i32) {
    %c0_i32 = arith.constant 0 : i32
    %c0_i32_0 = arith.constant 0 : i32
    return %arg0, %c0_i32 : i32, i32
  }
  func.func @transform_1(%arg0: i32) -> (i32, i32) {
    %c0_i32 = arith.constant 0 : i32
    %c0_i32_0 = arith.constant 0 : i32
    return %arg0, %c0_i32 : i32, i32
  }
}

</mosaic_0001>

<llo_original>
// kernel: run.1
$region0: #{run.1}
  #allocation0 [shape = 'u32[]', space=smem, size = 0x4, offset = 0x4, fixed_abs, tag = 'smem constant byte address 0x4 - core index']
  #allocation1 [shape = 'u32[144,128]{1,0:T(1,128)}', space=vmem, size = 0x12000, scoped, tag = 'internal scratch']
  %s0 = inlined_call_operand.vmem [shape: s32[10,3], index: 0, kind: input, shape index: {}]
  %s1 = inlined_call_operand.hbm [shape: f32[10,16], index: 1, kind: output, shape index: {}]
  %s2 = sld [smem:[#allocation0]]
  $region37: #{run.1} parent=0
    _
  %s4 = ssub.s32 1, %s2
  %s5 = scalar_select 0, %s4, %s2
  $region1: #{run.1} parent=0
    #allocation2 [shape = 'u8[8192]{0}', space=vmem, size = 0x2000, scoped, tag = 'output window, operand 0']
    #allocation3 [shape = 's32[2]{0}', space=sflag, size = 0x8, scoped, tag = 'scoped memory for run.1']
    %6 = vsyncpa [#allocation3], 0
    %s7 = scalar_lea.sflag [#allocation3], 1
    %8 = vsyncpa %s7, 0
    loop: start=0, step=1, limit=4
    $region2: #{run.1} parent=1 // loop_pre_header
      _
    $region3: #{run.1} parent=1 // loop_header
      %s10 = sphi 0, %s14
      %p11 = scmp.ge.s32.totalorder %s10, 4
      %s20 = sphi 0, %s22
      %s23 = sphi 0, %s20
      %s24 = sphi 0, %s23
      %s40 = sphi 0, %s24
      %s46 = sphi 0, %s48
      %s49 = sphi 0, %s46
      %s50 = sphi 0, %s49
      %s66 = sphi 0, %s50
    $region4: #{run.1} parent=1 // loop_header_branch
      %13 = sbr.rel (%p11) target = $region8
    $region5: #{run.1} parent=1 // loop_body
      %s15 = ssub.s32 %s10, 1
      %s16 = ssub.s32 %s10, 2
      %s17 = sadd.s32 %s10, 1
      %s18 = ssub.s32 %s10, %s17
      %p19 = scmp.eq.s32.totalorder %s18, 0
      %s21 = sadd.s32 %s20, 1
      %s22 = scalar_select %p19, %s20, %s21
      %p25 = pneg %p19
      %p26 = scmp.eq.s32.totalorder %s10, 1
      %p27 = por %p25, %p26
      %p28 = scmp.ne.s32.totalorder %s20, %s23
      %p29 = scmp.eq.s32.totalorder %s10, 0
      %p30 = por %p28, %p29
      %p31 = scmp.ne.s32.totalorder %s20, %s23
      %p32 = scmp.eq.s32.totalorder %s15, 1
      %p33 = por %p31, %p32
      %p34 = scmp.ne.s32.totalorder %s23, %s24
      %p35 = scmp.eq.s32.totalorder %s15, 0
      %p36 = por %p34, %p35
      %p37 = scmp.ne.s32.totalorder %s23, %s24
      %p38 = scmp.eq.s32.totalorder %s16, 1
      %p39 = por %p37, %p38
      %p41 = scmp.ne.s32.totalorder %s24, %s40
      %p42 = scmp.eq.s32.totalorder %s16, 0
      %p43 = por %p41, %p42
      %s44 = ssub.s32 %s10, %s17
      %p45 = scmp.eq.s32.totalorder %s44, 0
      %s47 = sadd.s32 %s46, 1
      %s48 = scalar_select %p45, %s46, %s47
      %p51 = pneg %p45
      %p52 = scmp.eq.s32.totalorder %s10, 1
      %p53 = por %p51, %p52
      %p54 = scmp.ne.s32.totalorder %s46, %s49
      %p55 = scmp.eq.s32.totalorder %s10, 0
      %p56 = por %p54, %p55
      %p57 = scmp.ne.s32.totalorder %s46, %s49
      %p58 = scmp.eq.s32.totalorder %s15, 1
      %p59 = por %p57, %p58
      %p60 = scmp.ne.s32.totalorder %s49, %s50
      %p61 = scmp.eq.s32.totalorder %s15, 0
      %p62 = por %p60, %p61
      %p63 = scmp.ne.s32.totalorder %s49, %s50
      %p64 = scmp.eq.s32.totalorder %s16, 1
      %p65 = por %p63, %p64
      %p67 = scmp.ne.s32.totalorder %s50, %s66
      %p68 = scmp.eq.s32.totalorder %s16, 0
      %p69 = por %p67, %p68
      %p70 = scmp.le.s32.totalorder 1, %s10
      %p71 = scmp.lt.s32.totalorder %s10, 3
      %p72 = pnand %p70, %p71
      %p73 = pneg %p72
      // Predicated region
      $region9: #{run.1} parent=5 // pred_check
        _
      $region10: #{run.1} parent=5 // pred_check_branch
        %75 = sbr.rel (%p72) target = $region12
      $region11: #{run.1} parent=5 // pred_region
        %s76 = ssub.s32 %s10, 1
      $region12: #{run.1} parent=5 // pred_fallthru
        _
      %p77 = scmp.lt.s32.totalorder %s10, 2
      // Predicated region
      $region13: #{run.1} parent=5 // pred_check
        %p78 = pneg %p77
      $region14: #{run.1} parent=5 // pred_check_branch
        %80 = sbr.rel (%p78) target = $region16
      $region15: #{run.1} parent=5 // pred_region
        // Predicated region
        $region17: #{run.1} parent=15 // pred_check
          %p81 = pneg %p30
        $region18: #{run.1} parent=15 // pred_check_branch
          %83 = sbr.rel (%p81) target = $region20
        $region19: #{run.1} parent=15 // pred_region
          %p84 = scmp.lt.s32.totalorder %s10, 1
          %s85 = scalar_select %p84, %s10, 1
          %s86 = smul.addr %s85, 8
          %s87 = scalar_lea.vmem %s0, %s86
        $region20: #{run.1} parent=15 // pred_fallthru
          _
      $region16: #{run.1} parent=5 // pred_fallthru
        _
      %p88 = scmp.le.s32.totalorder 1, %s10
      %p89 = scmp.lt.s32.totalorder %s10, 3
      %p90 = pnand %p88, %p89
      %p91 = pneg %p90
      // Predicated region
      $region21: #{run.1} parent=5 // pred_check
        _
      $region22: #{run.1} parent=5 // pred_check_branch
        %93 = sbr.rel (%p90) target = $region24
      $region23: #{run.1} parent=5 // pred_region
        %s94 = ssub.s32 %s10, 1
        %p95 = scmp.lt.s32.totalorder %s15, 1
        %s96 = scalar_select %p95, %s15, 1
        %s97 = smul.addr %s96, 8
        %s98 = scalar_lea.vmem %s0, %s97
        %p99 = pneg %p36
        %p100 = pneg %p33
        %p101 = pneg %p62
        %p102 = pneg %p59
        %s103 = sand.u32 %s49, 1
        %s104 = scalar_lea.sflag [#allocation3], %s103
        %s105 = sand.u32 %s49, 1
        %s106 = smul.addr %s105, 8
        %s107 = scalar_lea.vmem [#allocation2], %s106
        %p108 = scmp.lt.s32.totalorder %s15, 1
        %s109 = scalar_select %p108, %s15, 1
        %s110 = smul.addr %s109, 8
        %s111 = scalar_lea.vmem %s0, %s110
        %v112 = vld [vmem:[%s111] sm:$0xff]
        %v113 = vlaneseq
        %v114 = vand.u32 %v113, 127
        %v115 = vadd.s32 %v112, 9
        %vm116 = vcmp.lt.s32.totalorder %v114, 9
        %v117 = vadd.s32 %v112, 4
        %v118 = vsel %vm116, 1, 0
        %vm119 = vcmp.eq.s32.totalorder %v118, 1
        %120 = vset.pattern.permute.xlu0 1
        %121 = vperm.xlu0 %120, %v117
        %v122 = vpop.permute.xlu0 %121
        %123 = vset.pattern.permute.xlu0 2
        %124 = vperm.xlu0 %123, %v115
        %v125 = vpop.permute.xlu0 %124
        %v126 = vsel %vm119, %v122, %v125
        %vm127 = vcmp.lt.s32.totalorder %v114, 4
        %v128 = vsel %vm127, 1, 0
        %vm129 = vcmp.eq.s32.totalorder %v128, 1
        %130 = vset.pattern.permute.xlu0 0
        %131 = vperm.xlu0 %130, %v112
        %v132 = vpop.permute.xlu0 %131
        %v133 = vsel %vm129, %v132, %v126
        %vm134 = vcmp.eq.s32.totalorder %v114, %v133
        %v135 = vsel %vm134, 1, 0
        %v136 = vcvt.s32.f32 %v135
        %vm137 = vcmask 130048
        %138 = vst.msk [vmem:[%s107] sm:$0xff] %vm137, %v136
        %s139 = sand.u32 %s49, 1
        %s140 = scalar_lea.sflag [#allocation3], %s139
        %s141 = sand.u32 %s49, 1
        %s142 = smul.addr %s141, 8
        %s143 = scalar_lea.vmem [#allocation2], %s142
        // Predicated region
        $region25: #{run.1} parent=23 // pred_check
          %p144 = pneg %p59
        $region26: #{run.1} parent=23 // pred_check_branch
          %146 = sbr.rel (%p144) target = $region28
        $region27: #{run.1} parent=23 // pred_region
          %s148 = ssub.s32 128, 128
          %149 = vsyncadd %s140, %s148
          %s150 = smul.addr %s15, 128
          %s151 = scalar_lea.hbm %s1, %s150
          %s153 = sshll.u32 %s143, 4
          %s154 = int_to_ptr.vmem [resolvable:$true] %s153
          %156 = dma.vmem_to_hbm [thread:$0]  %s154, 128, %s151, %s140
        $region28: #{run.1} parent=23 // pred_fallthru
          _
      $region24: #{run.1} parent=5 // pred_fallthru
        _
      %p157 = scmp.le.s32.totalorder 2, %s10
      // Predicated region
      $region29: #{run.1} parent=5 // pred_check
        %p158 = pneg %p157
      $region30: #{run.1} parent=5 // pred_check_branch
        %160 = sbr.rel (%p158) target = $region32
      $region31: #{run.1} parent=5 // pred_region
        %s161 = ssub.s32 %s10, 2
        // Predicated region
        $region33: #{run.1} parent=31 // pred_check
          %p162 = pneg %p65
        $region34: #{run.1} parent=31 // pred_check_branch
          %164 = sbr.rel (%p162) target = $region36
        $region35: #{run.1} parent=31 // pred_region
          %s165 = sand.u32 %s50, 1
          %s166 = scalar_lea.sflag [#allocation3], %s165
          %s167 = sand.u32 %s50, 1
          %s168 = smul.addr %s167, 8
          %s169 = scalar_lea.vmem [#allocation2], %s168
          %170 = dma.done %s166, 128
        $region36: #{run.1} parent=31 // pred_fallthru
          _
      $region32: #{run.1} parent=5 // pred_fallthru
        _
    $region6: #{run.1} parent=1 // loop_footer
      %s14 = sadd.s32 1, %s10
    $region7: #{run.1} parent=1 // loop_footer_branch
      %9 = sbr.rel target = $region3
    $region8: #{run.1} parent=1 // loop_exit
      _
    %171 = vsyncpa [#allocation3], 1
    %s172 = scalar_lea.sflag [#allocation3], 1
    %173 = vsyncpa %s172, 1

</llo_original>
